<compile_context>
chip_gen: v5e
topology: v5e:2x2
jax: 0.10.0
libtpu: 0.0.40
codegen_flags: <defaults>
</compile_context>

<pallas_src>
import jax
import jax.numpy as jnp
from jax import lax
from jax.experimental import pallas as pl
from jax.experimental.pallas import tpu as pltpu

_LANE = 128
_MAX_TILE = 32768      # max batch columns per grid step (lane multiple)
_MAX_CHUNK = 512       # max batch columns per inner-loop iteration


def _round_up(x, m):
    return -(-x // m) * m


def _min_grid_steps():
    """>=2 grid steps on dual-TensorCore chips (v7x); 1 elsewhere (v5e/v6e)."""
    try:
        kind = jax.devices()[0].device_kind.lower()
    except Exception:
        return 1
    return 2 if ("v7" in kind or "7x" in kind) else 1


def _pick_tile(batch, min_steps):
    lanes = _round_up(batch, _LANE)
    return min(_MAX_TILE, _round_up(-(-lanes // min_steps), _LANE))


def _pick_chunk(tile):
    for c in (_MAX_CHUNK, 384, 256, _LANE):
        if tile % c == 0:
            return c
    return _LANE


def _pack_params(params):
    """Consolidate params into one column slab (+ optional W^T slab)."""
    layer_dims = [(int(w.shape[0]), int(w.shape[1])) for (w, _) in params]
    pdtype = params[0][0].dtype

    col_segs = []
    cur = 0

    def add_col(vec2d):
        nonlocal cur
        n = vec2d.shape[0]
        npad = _round_up(n, 8)                      # keep slices sublane-aligned
        seg = vec2d.astype(pdtype)
        if npad != n:
            seg = jnp.pad(seg, ((0, npad - n), (0, 0)))
        col_segs.append(seg)
        off = cur
        cur += npad
        return off

    modes, b_off, wcol_off, w_off = [], [], [], []
    w_blocks = []
    wcur = 0
    for (w, b), (din, dout) in zip(params, layer_dims):
        b_off.append(add_col(b.reshape(dout, 1)))
        if din == 1:                                 # first layer: VPU outer product
            modes.append("bcast")
            wcol_off.append(add_col(w.reshape(dout, 1)))
            w_off.append(-1)
        elif dout == 1:                              # last layer: multiply + reduce
            modes.append("reduce")
            wcol_off.append(add_col(w.reshape(din, 1)))
            w_off.append(-1)
        else:                                        # hidden x hidden: MXU
            modes.append("mxu")
            wcol_off.append(-1)
            wt = jnp.asarray(w).T.astype(pdtype)     # (dout, din) = W^T
            rpad = _round_up(dout, 8)
            if rpad != dout:
                wt = jnp.pad(wt, ((0, rpad - dout), (0, 0)))
            w_blocks.append(wt)
            w_off.append(wcur)
            wcur += rpad

    col_slab = jnp.concatenate(col_segs, axis=0)
    w_slab = None
    if w_blocks:
        n_cols = w_blocks[0].shape[1]
        assert all(blk.shape[1] == n_cols for blk in w_blocks), (
            "hidden layers must share in_features to share one W^T slab")
        w_slab = jnp.concatenate(w_blocks, axis=0)
    return layer_dims, modes, b_off, wcol_off, w_off, col_slab, w_slab


def _make_kernel(layer_dims, modes, b_off, wcol_off, w_off, has_w, chunk, n_chunks):
    def layer_stack(h, col_ref, w_ref):
        # h: (in0, chunk) f32  ->  (out_last, chunk) f32
        for l, (din, dout) in enumerate(layer_dims):
            b = col_ref[b_off[l]:b_off[l] + dout, :].astype(jnp.float32)
            if modes[l] == "bcast":                 # (dout,1) * (1,chunk) on the VPU
                w = col_ref[wcol_off[l]:wcol_off[l] + dout, :].astype(jnp.float32)
                z = w * h + b
            elif modes[l] == "reduce":              # multiply + sublane reduce (XLU)
                w = col_ref[wcol_off[l]:wcol_off[l] + din, :].astype(jnp.float32)
                z = jnp.sum(w * h, axis=0, keepdims=True) + b
            else:                                   # MXU, f32 accumulation
                wt = w_ref[w_off[l]:w_off[l] + dout, :]
                z = jnp.dot(wt, h.astype(wt.dtype),
                            preferred_element_type=jnp.float32) + b
            # sigmoid(z) == 0.5*tanh(0.5*z) + 0.5   (EUP only, stays in f32)
            h = 0.5 * jnp.tanh(0.5 * z) + 0.5
        return h

    def kernel(*refs):
        if has_w:
            x_ref, col_ref, w_ref, out_ref = refs
        else:
            x_ref, col_ref, out_ref = refs
            w_ref = None

        if n_chunks == 1:
            out_ref[...] = layer_stack(
                x_ref[...].astype(jnp.float32), col_ref, w_ref).astype(out_ref.dtype)
        else:
            # Inner lane-chunk loop bounds vreg pressure for large batch tiles.
            def body(c, carry):
                s = pl.multiple_of(c * chunk, chunk)
                h = x_ref[:, pl.ds(s, chunk)].astype(jnp.float32)
                out_ref[:, pl.ds(s, chunk)] = layer_stack(
                    h, col_ref, w_ref).astype(out_ref.dtype)
                return carry
            lax.fori_loop(0, n_chunks, body, 0)

    return kernel


def sigmoid_net_forward(x, params, *, interpret=False):
    """x: (B, in_features); params: list of (w, b) with w: (in, out), b: (out,)."""
    B, in0 = x.shape
    out_last = int(params[-1][0].shape[1])
    dtype = x.dtype

    (layer_dims, modes, b_off, wcol_off, w_off,
     col_slab, w_slab) = _pack_params(params)
    assert layer_dims[0][0] == in0, "x feature dim must match first layer"

    min_steps = _min_grid_steps()
    tile = _pick_tile(B, min_steps)
    chunk = _pick_chunk(tile)
    n_chunks = tile // chunk
    n_tiles = pl.cdiv(B, tile)

    # Batch on the lane axis.  in0 == 1 for SigmoidNet, so this is a free
    # reshape (no layout copy); fall back to a transpose for generality.
    xs = x.reshape(1, B) if in0 == 1 else x.T

    operands = [xs, col_slab]
    # TODO(synk): pipeline_mode=pl.Buffered(1) on the constant-index param specs
    # would drop their double buffering; skipped to keep lowering conservative
    # (their footprint is only a few KiB after consolidation).
    in_specs = [
        pl.BlockSpec((in0, tile), lambda i: (0, i)),
        pl.BlockSpec(col_slab.shape, lambda i: (0, 0)),
    ]
    if w_slab is not None:
        operands.append(w_slab)
        in_specs.append(pl.BlockSpec(w_slab.shape, lambda i: (0, 0)))

    out_spec = pl.BlockSpec((out_last, tile), lambda i: (0, i))

    # Advisory cost estimate for the XLA scheduler.
    itemsize = jnp.dtype(dtype).itemsize
    param_bytes = int(col_slab.size) * col_slab.dtype.itemsize
    if w_slab is not None:
        param_bytes += int(w_slab.size) * w_slab.dtype.itemsize
    flops = 2 * B * sum(din * dout for (din, dout) in layer_dims)
    transcendentals = 2 * B * sum(dout for (_, dout) in layer_dims)
    bytes_accessed = B * (in0 + out_last) * itemsize + param_bytes

    # VMEM: double-buffered in/out tiles + resident params + spilled f32
    # activations for one chunk.  Raise the scoped limit only if the 32 MiB
    # default would not fit, clamped below the chip's physical VMEM (v7x: 64 MiB).
    max_feat = max([in0] + [dout for (_, dout) in layer_dims])
    est_vmem = (2 * 2 * tile * (in0 + out_last) * itemsize
                + 2 * param_bytes
                + 4 * chunk * max_feat * 4
                + (2 << 20))
    cp_kwargs = dict(dimension_semantics=("parallel",))
    if est_vmem > (32 << 20):
        cap = 48 << 20
        try:
            cap = max(32 << 20,
                      int(pltpu.get_tpu_info().vmem_capacity_bytes) - (16 << 20))
        except Exception:
            pass
        cp_kwargs["vmem_limit_bytes"] = int(min(est_vmem, cap))

    kernel = _make_kernel(layer_dims, modes, b_off, wcol_off, w_off,
                          w_slab is not None, chunk, n_chunks)

    out = pl.pallas_call(
        kernel,
        out_shape=jax.ShapeDtypeStruct((out_last, B), dtype),
        grid_spec=pltpu.PrefetchScalarGridSpec(
            num_scalar_prefetch=0,
            grid=(n_tiles,),
            in_specs=in_specs,
            out_specs=out_spec,
        ),
        compiler_params=pltpu.CompilerParams(**cp_kwargs),
        cost_estimate=pl.CostEstimate(
            flops=int(flops),
            transcendentals=int(transcendentals),
            bytes_accessed=int(bytes_accessed),
        ),
        interpret=interpret,
    )(*operands)

    # Back to (B, out_features); out_last == 1 so this is a free reshape.
    return out.reshape(B, out_last) if out_last == 1 else out.T


def init_sigmoid_net_params(key, hidden_neuron=2, num_layer=2, dtype=jnp.float32):
    """Deterministic init mirroring nn.Linear default (U[-1/sqrt(fan_in), ...])."""
    assert num_layer >= 2, "SigmoidNet has at least two linear layers"
    dims = [1] + [hidden_neuron] * (num_layer - 1) + [1]
    params = []
    for l in range(num_layer):
        fan_in, fan_out = dims[l], dims[l + 1]
        key, kw, kb = jax.random.split(key, 3)
        bound = 1.0 / (fan_in ** 0.5)
        w = jax.random.uniform(kw, (fan_in, fan_out), dtype, -bound, bound)
        b = jax.random.uniform(kb, (fan_out,), dtype, -bound, bound)
        params.append((w, b))
    return params


def sigmoid_net_ref(x, params):
    h = x
    for (w, b) in params:
        h = jax.nn.sigmoid(h @ w + b)
    return h


if __name__ == "__main__":
    key = jax.random.PRNGKey(0)
    hidden_neuron = 32
    num_layer = 3          # Linear(1,32) -> Linear(32,32) -> Linear(32,1), sigmoid after each
    batch = 300            # not a lane multiple: exercises the ragged last block

    key, kx = jax.random.split(key)
    x = jax.random.normal(kx, (batch, 1), dtype=jnp.float32)

    params = init_sigmoid_net_params(key, hidden_neuron=hidden_neuron,
                                     num_layer=num_layer)

    out = sigmoid_net_forward(x, params)
    out = jax.block_until_ready(out)

    ref = sigmoid_net_ref(x, params)
    assert out.shape == (batch, 1)
    err = float(jnp.max(jnp.abs(out - ref)))
    assert jnp.allclose(out, ref, rtol=1e-5, atol=1e-5), f"mismatch: max abs err {err}"

    print("KERNEL_OK")
</pallas_src>

<mosaic_0001>
module attributes {stable_mosaic.version = 11 : i64} {
  func.func @kernel(%arg0: i32, %arg1: memref<1x384xf32, #tpu.memory_space<vmem>>, %arg2: memref<136x1xf32, #tpu.memory_space<vmem>>, %arg3: memref<32x32xf32, #tpu.memory_space<vmem>>, %arg4: memref<1x384xf32, #tpu.memory_space<vmem>>) attributes {dimension_semantics = [#tpu.dimension_semantics<parallel>], iteration_bounds = array<i64: 1>, scalar_prefetch = 0 : i64, scratch_operands = 0 : i64, tpu.core_type = #tpu.core_type<tc>, window_params = [{transform_indices = @transform_0, window_bounds = array<i64: 1, 384>}, {pipeline_mode = #tpu.pipeline_mode<synchronous>, transform_indices = @transform_1, window_bounds = array<i64: 136, 1>}, {pipeline_mode = #tpu.pipeline_mode<synchronous>, transform_indices = @transform_2, window_bounds = array<i64: 32, 32>}, {transform_indices = @transform_3, window_bounds = array<i64: 1, 384>}]} {
    %c0 = arith.constant 0 : index
    %c0_0 = arith.constant 0 : index
    %0 = vector.load %arg1[%c0, %c0_0] : memref<1x384xf32, #tpu.memory_space<vmem>>, vector<1x384xf32>
    %c0_1 = arith.constant 0 : index
    %c0_2 = arith.constant 0 : index
    %1 = vector.load %arg2[%c0_1, %c0_2] : memref<136x1xf32, #tpu.memory_space<vmem>>, vector<32x1xf32>
    %c32 = arith.constant 32 : index
    %c0_3 = arith.constant 0 : index
    %2 = vector.load %arg2[%c32, %c0_3] : memref<136x1xf32, #tpu.memory_space<vmem>>, vector<32x1xf32>
    %3 = vector.broadcast %2 : vector<32x1xf32> to vector<32x384xf32>
    %4 = vector.broadcast %0 : vector<1x384xf32> to vector<32x384xf32>
    %5 = arith.mulf %3, %4 : vector<32x384xf32>
    %6 = vector.broadcast %1 : vector<32x1xf32> to vector<32x384xf32>
    %7 = arith.addf %5, %6 : vector<32x384xf32>
    %cst = arith.constant 5.000000e-01 : f32
    %8 = vector.broadcast %cst : f32 to vector<32x384xf32>
    %9 = arith.mulf %8, %7 : vector<32x384xf32>
    %10 = math.tanh %9 : vector<32x384xf32>
    %cst_4 = arith.constant 5.000000e-01 : f32
    %11 = vector.broadcast %cst_4 : f32 to vector<32x384xf32>
    %12 = arith.mulf %11, %10 : vector<32x384xf32>
    %cst_5 = arith.constant 5.000000e-01 : f32
    %13 = vector.broadcast %cst_5 : f32 to vector<32x384xf32>
    %14 = arith.addf %12, %13 : vector<32x384xf32>
    %c64 = arith.constant 64 : index
    %c0_6 = arith.constant 0 : index
    %15 = vector.load %arg2[%c64, %c0_6] : memref<136x1xf32, #tpu.memory_space<vmem>>, vector<32x1xf32>
    %c0_7 = arith.constant 0 : index
    %c0_8 = arith.constant 0 : index
    %16 = vector.load %arg3[%c0_7, %c0_8] : memref<32x32xf32, #tpu.memory_space<vmem>>, vector<32x32xf32>
    %cst_9 = arith.constant dense<0.000000e+00> : vector<32x384xf32>
    %17 = tpu.matmul %16, %14, %cst_9 {dimension_numbers = #tpu.dot_dimension_numbers<[1], [0], [0], [1], [0, 0, 1, 1], [], []>} : vector<32x32xf32>, vector<32x384xf32>, vector<32x384xf32> -> vector<32x384xf32>
    %18 = vector.broadcast %15 : vector<32x1xf32> to vector<32x384xf32>
    %19 = arith.addf %17, %18 : vector<32x384xf32>
    %cst_10 = arith.constant 5.000000e-01 : f32
    %20 = vector.broadcast %cst_10 : f32 to vector<32x384xf32>
    %21 = arith.mulf %20, %19 : vector<32x384xf32>
    %22 = math.tanh %21 : vector<32x384xf32>
    %cst_11 = arith.constant 5.000000e-01 : f32
    %23 = vector.broadcast %cst_11 : f32 to vector<32x384xf32>
    %24 = arith.mulf %23, %22 : vector<32x384xf32>
    %cst_12 = arith.constant 5.000000e-01 : f32
    %25 = vector.broadcast %cst_12 : f32 to vector<32x384xf32>
    %26 = arith.addf %24, %25 : vector<32x384xf32>
    %c96 = arith.constant 96 : index
    %c0_13 = arith.constant 0 : index
    %27 = vector.load %arg2[%c96, %c0_13] : memref<136x1xf32, #tpu.memory_space<vmem>>, vector<1x1xf32>
    %c104 = arith.constant 104 : index
    %c0_14 = arith.constant 0 : index
    %28 = vector.load %arg2[%c104, %c0_14] : memref<136x1xf32, #tpu.memory_space<vmem>>, vector<32x1xf32>
    %29 = vector.broadcast %28 : vector<32x1xf32> to vector<32x384xf32>
    %30 = arith.mulf %29, %26 : vector<32x384xf32>
    %cst_15 = arith.constant dense<0.000000e+00> : vector<384xf32>
    %31 = vector.multi_reduction <add>, %30, %cst_15 [0] : vector<32x384xf32> to vector<384xf32>
    %32 = vector.shape_cast %31 : vector<384xf32> to vector<1x384xf32>
    %33 = vector.broadcast %27 : vector<1x1xf32> to vector<1x384xf32>
    %34 = arith.addf %32, %33 : vector<1x384xf32>
    %cst_16 = arith.constant 5.000000e-01 : f32
    %35 = vector.broadcast %cst_16 : f32 to vector<1x384xf32>
    %36 = arith.mulf %35, %34 : vector<1x384xf32>
    %37 = math.tanh %36 : vector<1x384xf32>
    %cst_17 = arith.constant 5.000000e-01 : f32
    %38 = vector.broadcast %cst_17 : f32 to vector<1x384xf32>
    %39 = arith.mulf %38, %37 : vector<1x384xf32>
    %cst_18 = arith.constant 5.000000e-01 : f32
    %40 = vector.broadcast %cst_18 : f32 to vector<1x384xf32>
    %41 = arith.addf %39, %40 : vector<1x384xf32>
    %c0_19 = arith.constant 0 : index
    %c0_20 = arith.constant 0 : index
    %42 = vector.load %arg4[%c0_19, %c0_20] : memref<1x384xf32, #tpu.memory_space<vmem>>, vector<1x384xf32>
    tpu.vector_store %arg4[%c0_19, %c0_20], %41 {strides = array<i32>} : memref<1x384xf32, #tpu.memory_space<vmem>>, vector<1x384xf32>,
    return
  }
  func.func @transform_0(%arg0: i32) -> (i32, i32) {
    %c0_i32 = arith.constant 0 : i32
    %c0_i32_0 = arith.constant 0 : i32
    return %c0_i32, %arg0 : i32, i32
  }
  func.func @transform_1(%arg0: i32) -> (i32, i32) {
    %c0_i32 = arith.constant 0 : i32
    %c0_i32_0 = arith.constant 0 : i32
    %c0_i32_1 = arith.constant 0 : i32
    return %c0_i32, %c0_i32_0 : i32, i32
  }
  func.func @transform_2(%arg0: i32) -> (i32, i32) {
    %c0_i32 = arith.constant 0 : i32
    %c0_i32_0 = arith.constant 0 : i32
    %c0_i32_1 = arith.constant 0 : i32
    return %c0_i32, %c0_i32_0 : i32, i32
  }
  func.func @transform_3(%arg0: i32) -> (i32, i32) {
    %c0_i32 = arith.constant 0 : i32
    %c0_i32_0 = arith.constant 0 : i32
    return %c0_i32, %arg0 : i32, i32
  }
}

</mosaic_0001>

<llo_original>
// kernel: tpu_custom_call.1
$region0: #{tpu_custom_call.1}
  #allocation0 [shape = 'u32[]', space=smem, size = 0x4, offset = 0x4, fixed_abs, tag = 'smem constant byte address 0x4 - core index']
  #allocation1 [shape = 'u32[72,128]{1,0:T(1,128)}', space=vmem, size = 0x9000, scoped, tag = 'internal scratch']
  %s0 = inlined_call_operand.vmem [shape: f32[1,300], index: 0, kind: input, shape index: {}]
  %s1 = inlined_call_operand.vmem [shape: f32[136,1], index: 1, kind: input, shape index: {}]
  %s2 = inlined_call_operand.vmem [shape: f32[32,32], index: 2, kind: input, shape index: {}]
  %s3 = inlined_call_operand.hbm [shape: f32[1,300], index: 3, kind: output, shape index: {}]
  %s4 = sld [smem:[#allocation0]]
  $region22: #{tpu_custom_call.1} parent=0
    _
  %s6 = ssub.s32 1, %s4
  %s7 = scalar_select 0, %s6, %s4
  $region1: #{tpu_custom_call.1} parent=0
    #allocation2 [shape = 'u8[1536]{0}', space=vmem, size = 0x800, scoped, tag = 'output window, operand 0, single buffered']
    #allocation3 [shape = 's32[1]{0}', space=sflag, size = 0x4, scoped, tag = 'scoped memory for tpu_custom_call.1']
    %8 = vsyncpa [#allocation3], 0
    // Predicated region
    $region2: #{tpu_custom_call.1} parent=1 // pred_check
      _
    $region3: #{tpu_custom_call.1} parent=1 // pred_check_branch
      %10 = sbr.rel (0) target = $region5
    $region4: #{tpu_custom_call.1} parent=1 // pred_region
      _
    $region5: #{tpu_custom_call.1} parent=1 // pred_fallthru
      _
    // Predicated region
    $region6: #{tpu_custom_call.1} parent=1 // pred_check
      _
    $region7: #{tpu_custom_call.1} parent=1 // pred_check_branch
      %12 = sbr.rel (0) target = $region9
    $region8: #{tpu_custom_call.1} parent=1 // pred_region
      _
    $region9: #{tpu_custom_call.1} parent=1 // pred_fallthru
      _
    // Predicated region
    $region10: #{tpu_custom_call.1} parent=1 // pred_check
      _
    $region11: #{tpu_custom_call.1} parent=1 // pred_check_branch
      %14 = sbr.rel (0) target = $region13
    $region12: #{tpu_custom_call.1} parent=1 // pred_region
      _
    $region13: #{tpu_custom_call.1} parent=1 // pred_fallthru
      _
    %v15 = vld [vmem:[%s0] sm:$0x7]
    %v16 = vld [vmem:[%s1] sm:$0xff]
    %v17 = vld [vmem:[%s1 + $0x8] sm:$0xff]
    %v18 = vld [vmem:[%s1 + $0x10] sm:$0xff]
    %v19 = vld [vmem:[%s1 + $0x18] sm:$0xff]
    %v20 = vld [vmem:[%s1 + $0x20] sm:$0xff]
    %v21 = vld [vmem:[%s1 + $0x28] sm:$0xff]
    %v22 = vld [vmem:[%s1 + $0x30] sm:$0xff]
    %v23 = vld [vmem:[%s1 + $0x38] sm:$0xff]
    %25 = vset.pattern.permute.xlu0 0
    %26 = vperm.xlu0 %25, %v20
    %v27 = vpop.permute.xlu0 %26
    %30 = vset.pattern.permute.xlu0 0
    %31 = vperm.xlu0 %30, %v21
    %v32 = vpop.permute.xlu0 %31
    %35 = vset.pattern.permute.xlu0 0
    %36 = vperm.xlu0 %35, %v22
    %v37 = vpop.permute.xlu0 %36
    %40 = vset.pattern.permute.xlu0 0
    %41 = vperm.xlu0 %40, %v23
    %v42 = vpop.permute.xlu0 %41
    %v45 = vperm.slane %v15, 0
    %v46 = vperm.slane %v15, 1
    %v47 = vperm.slane %v15, 2
    %v51 = vmul.f32 %v27, %v45
    %v52 = vmul.f32 %v27, %v46
    %v53 = vmul.f32 %v27, %v47
    %v54 = vmul.f32 %v32, %v45
    %v55 = vmul.f32 %v32, %v46
    %v56 = vmul.f32 %v32, %v47
    %v57 = vmul.f32 %v37, %v45
    %v58 = vmul.f32 %v37, %v46
    %v59 = vmul.f32 %v37, %v47
    %v60 = vmul.f32 %v42, %v45
    %v61 = vmul.f32 %v42, %v46
    %v62 = vmul.f32 %v42, %v47
    %64 = vset.pattern.permute.xlu0 0
    %65 = vperm.xlu0 %64, %v16
    %v66 = vpop.permute.xlu0 %65
    %69 = vset.pattern.permute.xlu0 0
    %70 = vperm.xlu0 %69, %v17
    %v71 = vpop.permute.xlu0 %70
    %74 = vset.pattern.permute.xlu0 0
    %75 = vperm.xlu0 %74, %v18
    %v76 = vpop.permute.xlu0 %75
    %79 = vset.pattern.permute.xlu0 0
    %80 = vperm.xlu0 %79, %v19
    %v81 = vpop.permute.xlu0 %80
    %v83 = vadd.f32 %v51, %v66
    %v84 = vadd.f32 %v52, %v66
    %v85 = vadd.f32 %v53, %v66
    %v86 = vadd.f32 %v54, %v71
    %v87 = vadd.f32 %v55, %v71
    %v88 = vadd.f32 %v56, %v71
    %v89 = vadd.f32 %v57, %v76
    %v90 = vadd.f32 %v58, %v76
    %v91 = vadd.f32 %v59, %v76
    %v92 = vadd.f32 %v60, %v81
    %v93 = vadd.f32 %v61, %v81
    %v94 = vadd.f32 %v62, %v81
    %v95 = vmul.f32 %v83, 0.5
    %v96 = vmul.f32 %v84, 0.5
    %v97 = vmul.f32 %v85, 0.5
    %v98 = vmul.f32 %v86, 0.5
    %v99 = vmul.f32 %v87, 0.5
    %v100 = vmul.f32 %v88, 0.5
    %v101 = vmul.f32 %v89, 0.5
    %v102 = vmul.f32 %v90, 0.5
    %v103 = vmul.f32 %v91, 0.5
    %v104 = vmul.f32 %v92, 0.5
    %v105 = vmul.f32 %v93, 0.5
    %v106 = vmul.f32 %v94, 0.5
    %v107 = vtanh.pop %v95
    %v108 = vtanh.pop %v96
    %v109 = vtanh.pop %v97
    %v110 = vtanh.pop %v98
    %v111 = vtanh.pop %v99
    %v112 = vtanh.pop %v100
    %v113 = vtanh.pop %v101
    %v114 = vtanh.pop %v102
    %v115 = vtanh.pop %v103
    %v116 = vtanh.pop %v104
    %v117 = vtanh.pop %v105
    %v118 = vtanh.pop %v106
    %v119 = vmul.f32 %v107, 0.5
    %v120 = vmul.f32 %v108, 0.5
    %v121 = vmul.f32 %v109, 0.5
    %v122 = vmul.f32 %v110, 0.5
    %v123 = vmul.f32 %v111, 0.5
    %v124 = vmul.f32 %v112, 0.5
    %v125 = vmul.f32 %v113, 0.5
    %v126 = vmul.f32 %v114, 0.5
    %v127 = vmul.f32 %v115, 0.5
    %v128 = vmul.f32 %v116, 0.5
    %v129 = vmul.f32 %v117, 0.5
    %v130 = vmul.f32 %v118, 0.5
    %v131 = vadd.f32 %v119, 0.5
    %v132 = vadd.f32 %v120, 0.5
    %v133 = vadd.f32 %v121, 0.5
    %v134 = vadd.f32 %v122, 0.5
    %v135 = vadd.f32 %v123, 0.5
    %v136 = vadd.f32 %v124, 0.5
    %v137 = vadd.f32 %v125, 0.5
    %v138 = vadd.f32 %v126, 0.5
    %v139 = vadd.f32 %v127, 0.5
    %v140 = vadd.f32 %v128, 0.5
    %v141 = vadd.f32 %v129, 0.5
    %v142 = vadd.f32 %v130, 0.5
    %v143 = vld [vmem:[%s1 + $0x40] sm:$0xff]
    %v144 = vld [vmem:[%s1 + $0x48] sm:$0xff]
    %v145 = vld [vmem:[%s1 + $0x50] sm:$0xff]
    %v146 = vld [vmem:[%s1 + $0x58] sm:$0xff]
    %v147 = vld [vmem:[%s2] sm:$0xff]
    %v148 = vld [vmem:[%s2 + $0x8] sm:$0xff]
    %v149 = vld [vmem:[%s2 + $0x10] sm:$0xff]
    %v150 = vld [vmem:[%s2 + $0x18] sm:$0xff]
    %152 = vset.pattern.permute.xlu0 0
    %153 = vperm.xlu0 %152, %v143
    %v154 = vpop.permute.xlu0 %153
    %157 = vset.pattern.permute.xlu0 0
    %158 = vperm.xlu0 %157, %v144
    %v159 = vpop.permute.xlu0 %158
    %162 = vset.pattern.permute.xlu0 0
    %163 = vperm.xlu0 %162, %v145
    %v164 = vpop.permute.xlu0 %163
    %167 = vset.pattern.permute.xlu0 0
    %168 = vperm.xlu0 %167, %v146
    %v169 = vpop.permute.xlu0 %168
    %vm171 = vcmask 261120
    %v173 = vsel %vm171, %v147, 0
    %v176 = vsel %vm171, %v148, 0
    %v179 = vsel %vm171, %v149, 0
    %v182 = vsel %vm171, %v150, 0
    %184 = vmatpush.msra.mxu0 0.0
    %185 = vmatpush.msra.mxu0 0.0
    %186 = vmatpush.msra.mxu0 0.0
    %187 = vmatpush.msra.mxu0 0.0
    %188 = vmatpush.msra.mxu0 0.0
    %189 = vmatpush.msra.mxu0 0.0
    %190 = vmatpush.msra.mxu0 0.0
    %191 = vmatpush.msra.mxu0 0.0
    %192 = vmatpush.msra.mxu0 0.0
    %193 = vmatpush.msra.mxu0 0.0
    %194 = vmatpush.msra.mxu0 0.0
    %195 = vmatpush.msra.mxu0 0.0
    %196 = vmatpush.msra.mxu0 %v140
    %197 = vmatpush.msra.mxu0 %v137
    %198 = vmatpush.msra.mxu0 %v134
    %199 = vmatpush.msra.mxu0 %v131
    %200 = vmatmul.f32.gmra.mxu0 %v173
    %v201 = vpop.f32.mrf.mxu0
    %v202 = vadd.f32 %v154, %v201
    %203 = vmatmul.f32.gmra.mxu0 %v176
    %v204 = vpop.f32.mrf.mxu0
    %v205 = vadd.f32 %v159, %v204
    %206 = vmatmul.f32.gmra.mxu0 %v179
    %v207 = vpop.f32.mrf.mxu0
    %v208 = vadd.f32 %v164, %v207
    %209 = vmatmul.f32.gmra.mxu0 %v182
    %v210 = vpop.f32.mrf.mxu0
    %v211 = vadd.f32 %v169, %v210
    %212 = vdwg.mxu0
    %213 = vmatpush.msra.mxu0 0.0
    %214 = vmatpush.msra.mxu0 0.0
    %215 = vmatpush.msra.mxu0 0.0
    %216 = vmatpush.msra.mxu0 0.0
    %217 = vmatpush.msra.mxu0 0.0
    %218 = vmatpush.msra.mxu0 0.0
    %219 = vmatpush.msra.mxu0 0.0
    %220 = vmatpush.msra.mxu0 0.0
    %221 = vmatpush.msra.mxu0 0.0
    %222 = vmatpush.msra.mxu0 0.0
    %223 = vmatpush.msra.mxu0 0.0
    %224 = vmatpush.msra.mxu0 0.0
    %225 = vmatpush.msra.mxu0 %v141
    %226 = vmatpush.msra.mxu0 %v138
    %227 = vmatpush.msra.mxu0 %v135
    %228 = vmatpush.msra.mxu0 %v132
    %229 = vmatmul.f32.gmra.mxu0 %v173
    %v230 = vpop.f32.mrf.mxu0
    %v231 = vadd.f32 %v154, %v230
    %232 = vmatmul.f32.gmra.mxu0 %v176
    %v233 = vpop.f32.mrf.mxu0
    %v234 = vadd.f32 %v159, %v233
    %235 = vmatmul.f32.gmra.mxu0 %v179
    %v236 = vpop.f32.mrf.mxu0
    %v237 = vadd.f32 %v164, %v236
    %238 = vmatmul.f32.gmra.mxu0 %v182
    %v239 = vpop.f32.mrf.mxu0
    %v240 = vadd.f32 %v169, %v239
    %241 = vdwg.mxu0
    %242 = vmatpush.msra.mxu0 0.0
    %243 = vmatpush.msra.mxu0 0.0
    %244 = vmatpush.msra.mxu0 0.0
    %245 = vmatpush.msra.mxu0 0.0
    %246 = vmatpush.msra.mxu0 0.0
    %247 = vmatpush.msra.mxu0 0.0
    %248 = vmatpush.msra.mxu0 0.0
    %249 = vmatpush.msra.mxu0 0.0
    %250 = vmatpush.msra.mxu0 0.0
    %251 = vmatpush.msra.mxu0 0.0
    %252 = vmatpush.msra.mxu0 0.0
    %253 = vmatpush.msra.mxu0 0.0
    %254 = vmatpush.msra.mxu0 %v142
    %255 = vmatpush.msra.mxu0 %v139
    %256 = vmatpush.msra.mxu0 %v136
    %257 = vmatpush.msra.mxu0 %v133
    %258 = vmatmul.f32.gmra.mxu0 %v173
    %v259 = vpop.f32.mrf.mxu0
    %v260 = vadd.f32 %v154, %v259
    %261 = vmatmul.f32.gmra.mxu0 %v176
    %v262 = vpop.f32.mrf.mxu0
    %v263 = vadd.f32 %v159, %v262
    %264 = vmatmul.f32.gmra.mxu0 %v179
    %v265 = vpop.f32.mrf.mxu0
    %v266 = vadd.f32 %v164, %v265
    %267 = vmatmul.f32.gmra.mxu0 %v182
    %v268 = vpop.f32.mrf.mxu0
    %v269 = vadd.f32 %v169, %v268
    %270 = vdwg.mxu0
    %v271 = vmul.f32 %v202, 0.5
    %v272 = vmul.f32 %v231, 0.5
    %v273 = vmul.f32 %v260, 0.5
    %v274 = vmul.f32 %v205, 0.5
    %v275 = vmul.f32 %v234, 0.5
    %v276 = vmul.f32 %v263, 0.5
    %v277 = vmul.f32 %v208, 0.5
    %v278 = vmul.f32 %v237, 0.5
    %v279 = vmul.f32 %v266, 0.5
    %v280 = vmul.f32 %v211, 0.5
    %v281 = vmul.f32 %v240, 0.5
    %v282 = vmul.f32 %v269, 0.5
    %v283 = vtanh.pop %v271
    %v284 = vtanh.pop %v272
    %v285 = vtanh.pop %v273
    %v286 = vtanh.pop %v274
    %v287 = vtanh.pop %v275
    %v288 = vtanh.pop %v276
    %v289 = vtanh.pop %v277
    %v290 = vtanh.pop %v278
    %v291 = vtanh.pop %v279
    %v292 = vtanh.pop %v280
    %v293 = vtanh.pop %v281
    %v294 = vtanh.pop %v282
    %v295 = vmul.f32 %v283, 0.5
    %v296 = vmul.f32 %v284, 0.5
    %v297 = vmul.f32 %v285, 0.5
    %v298 = vmul.f32 %v286, 0.5
    %v299 = vmul.f32 %v287, 0.5
    %v300 = vmul.f32 %v288, 0.5
    %v301 = vmul.f32 %v289, 0.5
    %v302 = vmul.f32 %v290, 0.5
    %v303 = vmul.f32 %v291, 0.5
    %v304 = vmul.f32 %v292, 0.5
    %v305 = vmul.f32 %v293, 0.5
    %v306 = vmul.f32 %v294, 0.5
    %v307 = vadd.f32 %v295, 0.5
    %v308 = vadd.f32 %v296, 0.5
    %v309 = vadd.f32 %v297, 0.5
    %v310 = vadd.f32 %v298, 0.5
    %v311 = vadd.f32 %v299, 0.5
    %v312 = vadd.f32 %v300, 0.5
    %v313 = vadd.f32 %v301, 0.5
    %v314 = vadd.f32 %v302, 0.5
    %v315 = vadd.f32 %v303, 0.5
    %v316 = vadd.f32 %v304, 0.5
    %v317 = vadd.f32 %v305, 0.5
    %v318 = vadd.f32 %v306, 0.5
    %v319 = vld [vmem:[%s1 + $0x60] sm:$0x1]
    %v320 = vld [vmem:[%s1 + $0x68] sm:$0xff]
    %v321 = vld [vmem:[%s1 + $0x70] sm:$0xff]
    %v322 = vld [vmem:[%s1 + $0x78] sm:$0xff]
    %v323 = vld [vmem:[%s1 + $0x80] sm:$0xff]
    %325 = vset.pattern.permute.xlu0 0
    %326 = vperm.xlu0 %325, %v320
    %v327 = vpop.permute.xlu0 %326
    %330 = vset.pattern.permute.xlu0 0
    %331 = vperm.xlu0 %330, %v321
    %v332 = vpop.permute.xlu0 %331
    %335 = vset.pattern.permute.xlu0 0
    %336 = vperm.xlu0 %335, %v322
    %v337 = vpop.permute.xlu0 %336
    %340 = vset.pattern.permute.xlu0 0
    %341 = vperm.xlu0 %340, %v323
    %v342 = vpop.permute.xlu0 %341
    %v344 = vmul.f32 %v327, %v307
    %v345 = vmul.f32 %v327, %v308
    %v346 = vmul.f32 %v327, %v309
    %v347 = vmul.f32 %v332, %v310
    %v348 = vmul.f32 %v332, %v311
    %v349 = vmul.f32 %v332, %v312
    %v350 = vmul.f32 %v337, %v313
    %v351 = vmul.f32 %v337, %v314
    %v352 = vmul.f32 %v337, %v315
    %v353 = vmul.f32 %v342, %v316
    %v354 = vmul.f32 %v342, %v317
    %v355 = vmul.f32 %v342, %v318
    %v356 = vadd.f32 %v344, %v347
    %v357 = vadd.f32 %v356, %v350
    %v358 = vadd.f32 %v357, %v353
    %v359 = vrot.slane %v358, 4
    %v360 = vadd.f32 %v358, %v359
    %v361 = vrot.slane %v360, 2
    %v362 = vadd.f32 %v360, %v361
    %v363 = vrot.slane %v362, 1
    %v364 = vadd.f32 %v362, %v363
    %v365 = vadd.f32 %v345, %v348
    %v366 = vadd.f32 %v365, %v351
    %v367 = vadd.f32 %v366, %v354
    %v368 = vrot.slane %v367, 4
    %v369 = vadd.f32 %v367, %v368
    %v370 = vrot.slane %v369, 2
    %v371 = vadd.f32 %v369, %v370
    %v372 = vrot.slane %v371, 1
    %v373 = vadd.f32 %v371, %v372
    %v374 = vadd.f32 %v346, %v349
    %v375 = vadd.f32 %v374, %v352
    %v376 = vadd.f32 %v375, %v355
    %v377 = vrot.slane %v376, 4
    %v378 = vadd.f32 %v376, %v377
    %v379 = vrot.slane %v378, 2
    %v380 = vadd.f32 %v378, %v379
    %v381 = vrot.slane %v380, 1
    %v382 = vadd.f32 %v380, %v381
    %384 = vset.pattern.permute.xlu0 0
    %385 = vperm.xlu0 %384, %v319
    %v386 = vpop.permute.xlu0 %385
    %v388 = vadd.f32 %v364, %v386
    %v389 = vadd.f32 %v373, %v386
    %v390 = vadd.f32 %v382, %v386
    %v391 = vmul.f32 %v388, 0.5
    %v392 = vmul.f32 %v389, 0.5
    %v393 = vmul.f32 %v390, 0.5
    %v394 = vtanh.pop %v391
    %v395 = vtanh.pop %v392
    %v396 = vtanh.pop %v393
    %v397 = vmul.f32 %v394, 0.5
    %v398 = vmul.f32 %v395, 0.5
    %v399 = vmul.f32 %v396, 0.5
    %v400 = vadd.f32 %v397, 0.5
    %v401 = vadd.f32 %v398, 0.5
    %v402 = vadd.f32 %v399, 0.5
    %v406 = vrot.slane %v401, 7
    %v407 = vrot.slane %v402, 6
    %vm408 = vcmask 1040384
    %v409 = vsel %vm408, %v400, %v406
    %vm410 = vcmask 1041408
    %v411 = vsel %vm410, %v409, %v407
    %v413 = vlaneseq
    %vm414 = vcmp.ge.s32.totalorder %v413, 0
    %vm415 = vcmp.lt.s32.totalorder %v413, 384
    %vm416 = vmand %vm414, %vm415
    %417 = vst.msk [vmem:[#allocation2] sm:$0x7] %vm416, %v411
    // Predicated region
    $region14: #{tpu_custom_call.1} parent=1 // pred_check
      _
    $region15: #{tpu_custom_call.1} parent=1 // pred_check_branch
      %419 = sbr.rel (0) target = $region17
    $region16: #{tpu_custom_call.1} parent=1 // pred_region
      %421 = vsyncadd [#allocation3], 0
      %s423 = sshll.u32 [#allocation2], 4
      %s424 = int_to_ptr.vmem [resolvable:$true] %s423
      %s425 = sshll.u32 %s3, 4
      %s426 = int_to_ptr.hbm [resolvable:$true] %s425
      %428 = dma.vmem_to_hbm [thread:$0]  %s424, 48, %s426, [#allocation3]
    $region17: #{tpu_custom_call.1} parent=1 // pred_fallthru
      _
    // Predicated region
    $region18: #{tpu_custom_call.1} parent=1 // pred_check
      _
    $region19: #{tpu_custom_call.1} parent=1 // pred_check_branch
      %430 = sbr.rel (0) target = $region21
    $region20: #{tpu_custom_call.1} parent=1 // pred_region
      %432 = dma.done [#allocation3], 48
    $region21: #{tpu_custom_call.1} parent=1 // pred_fallthru
      _
    %433 = vsyncpa [#allocation3], 1

</llo_original>
